<compile_context>
chip_gen: v5e
topology: v5e:2x2
jax: 0.10.0
libtpu: 0.0.40
codegen_flags: <defaults>
</compile_context>

<pallas_src>
import jax
import jax.numpy as jnp
from jax.experimental import pallas as pl
from jax.experimental.pallas import tpu as pltpu

_LANE_PAD = 256   # hd_dim padded to a multiple of this (lane-dense tiles, >=2 N tiles)
_SUBLANE = 8


def _round_up(n, m):
    return ((n + m - 1) // m) * m


def _cdiv(a, b):
    return -(-a // b)


def _vmem_capacity_bytes():
    try:
        return int(pltpu.get_tpu_info().vmem_capacity_bytes)
    except Exception:
        return 64 << 20   # conservative fallback (v7x per-TensorCore VMEM)


# ----------------------------- kernels -----------------------------

def _fullk_kernel(x_ref, wt_ref, o_ref):
    """One (tm, tn) output tile: full-K matmul then hard quantize (+1 / -1)."""
    y = jnp.dot(x_ref[...], wt_ref[...], preferred_element_type=jnp.float32)
    o_ref[...] = jnp.where(y > 0, 1.0, -1.0).astype(o_ref.dtype)


def _ksplit_kernel(x_ref, wt_ref, o_ref, acc_ref):
    """K-tiled matmul with f32 VMEM accumulator; quantize on the last K step."""
    k = pl.program_id(2)

    @pl.when(k == 0)
    def _():
        acc_ref[...] = jnp.zeros_like(acc_ref)

    acc_ref[...] += jnp.dot(x_ref[...], wt_ref[...],
                            preferred_element_type=jnp.float32)

    @pl.when(k == pl.num_programs(2) - 1)
    def _():
        o_ref[...] = jnp.where(acc_ref[...] > 0, 1.0, -1.0).astype(o_ref.dtype)


# --------------------------- init / forward ---------------------------

def encoder_init(w, *, weight_dtype=None):
    """One-time setup for the non-trainable Projection weight.

    w: (hd_dim, size). Returns wt: (size, hd_pad) with hd_pad = round_up(hd_dim, 256),
    transposed and zero-padded ONCE so the forward hot path never reshapes/pads W.
    weight_dtype=jnp.bfloat16 halves the dominant HBM stream (signs of projections
    extremely close to 0 may then differ from the f32 reference).
    """
    wt = jnp.asarray(w).T
    if weight_dtype is not None:
        wt = wt.astype(weight_dtype)
    size, hd = wt.shape
    hd_pad = _round_up(hd, _LANE_PAD)
    if hd_pad != hd:
        wt = jnp.pad(wt, ((0, 0), (0, hd_pad - hd)))
    return wt


def _pick_tm(batch, cap=512):
    """Sublane-aligned batch tile <= cap that minimizes padding (prefer larger tm)."""
    cap = min(cap, _round_up(batch, _SUBLANE))
    best_tm, best_pad = _SUBLANE, None
    for tm in range(_SUBLANE, cap + 1, _SUBLANE):
        pad = _round_up(batch, tm) - batch
        if best_pad is None or pad < best_pad or (pad == best_pad and tm > best_tm):
            best_tm, best_pad = tm, pad
    return best_tm


def encoder_forward(x, wt, hd_dim=None, *, out_dtype=None, max_k=None, interpret=False):
    """hard_quantize(x @ W^T) for the torchhd Projection encoder.

    x : (batch, ...) -- flattened to (batch, size), matching nn.Flatten.
    wt: (size, hd_pad) from encoder_init (transposed + hd padded once).
    hd_dim: logical output dim (<= wt.shape[1]); defaults to wt.shape[1].
    out_dtype: output dtype (+-1 exact in bf16/int8); defaults to x.dtype (module contract).
    max_k: optional cap on the in-VMEM reduction chunk (mainly to exercise the K-split path).
    """
    x = x.reshape(x.shape[0], -1)            # nn.Flatten
    batch, size = x.shape
    k_w, hd_w = wt.shape
    assert k_w == size, "weight / input feature-size mismatch"
    hd_dim = hd_w if hd_dim is None else hd_dim
    assert hd_dim <= hd_w

    out_dtype = x.dtype if out_dtype is None else jnp.dtype(out_dtype)
    xb = x.dtype.itemsize
    wb = wt.dtype.itemsize
    ob = jnp.dtype(out_dtype).itemsize

    # Lane-dense hd padding (no-op when wt came from encoder_init).
    hd_pad = _round_up(hd_w, _LANE_PAD)
    wt_in = jnp.pad(wt, ((0, 0), (0, hd_pad - hd_w))) if hd_pad != hd_w else wt

    # Generation-aware VMEM budget for the (double-buffered) blocks.
    vmem_cap = _vmem_capacity_bytes()
    budget = (vmem_cap * 3) // 8              # ~24 MiB on v7x, ~48 MiB on v5e/v6e

    # Batch (M) tile: sublane-aligned, minimal padding, up to 512 rows.
    tm = _pick_tm(batch)
    padded_batch = _round_up(batch, tm)
    x_in = jnp.pad(x, ((0, padded_batch - batch), (0, 0))) if padded_batch != batch else x
    m_tiles = padded_batch // tm

    # Output (N) tile: lane-dense multiple of 128 dividing hd_pad, prefer >= 2 tiles (v7x).
    tn_cap = max(128, min(1024, hd_pad // 2))
    tn_cands = [t for t in (1024, 512, 256, 128) if t <= tn_cap and hd_pad % t == 0]
    tn_floor = 256 if any(t >= 256 for t in tn_cands) else tn_cands[0]

    def _fullk_bytes(tn):
        return 2 * (tm * size * xb + size * tn * wb + tm * tn * ob)

    fullk_tn = None
    if max_k is None or size <= max_k:
        for t in tn_cands:
            if t >= tn_floor and _fullk_bytes(t) <= budget:
                fullk_tn = t
                break

    if fullk_tn is not None:
        # ---- single pass: full reduction dim resident in VMEM ----
        tn = fullk_tn
        grid = (hd_pad // tn, m_tiles)        # batch innermost -> Wt block stays resident
        block_bytes = _fullk_bytes(tn)
        kernel = _fullk_kernel
        in_specs = [
            pl.BlockSpec((tm, size), lambda j, i: (i, 0)),
            pl.BlockSpec((size, tn), lambda j, i: (0, j)),
        ]
        out_spec = pl.BlockSpec((tm, tn), lambda j, i: (i, j))
        scratch_shapes = []
        dims = ("parallel", "parallel")
        flops_k = size
    else:
        # ---- K-split fallback: f32 accumulator, reduction axis innermost ----
        tn = tn_floor
        fixed = 2 * tm * tn * ob + tm * tn * 4          # out double-buffer + acc scratch
        per_k = 2 * (tm * xb + tn * wb)
        tk = max(budget - fixed, per_k * 128) // per_k
        tk = max(128, (tk // 128) * 128)
        if max_k is not None:
            tk = max(128, min(tk, (max_k // 128) * 128))
        tk = min(tk, _round_up(size, 128))
        nk = _cdiv(size, tk)
        tk = _round_up(_cdiv(size, nk), 128)            # rebalance to minimize K padding
        size_pad = nk * tk
        if size_pad != size:
            # TODO(synk): for production K-split shapes, pre-pad W along K once in encoder_init.
            x_in = jnp.pad(x_in, ((0, 0), (0, size_pad - size)))
            wt_in = jnp.pad(wt_in, ((0, size_pad - size), (0, 0)))
        grid = (hd_pad // tn, m_tiles, nk)
        block_bytes = 2 * (tm * tk * xb + tk * tn * wb + tm * tn * ob) + tm * tn * 4
        kernel = _ksplit_kernel
        in_specs = [
            pl.BlockSpec((tm, tk), lambda j, i, k: (i, k)),
            pl.BlockSpec((tk, tn), lambda j, i, k: (k, j)),
        ]
        out_spec = pl.BlockSpec((tm, tn), lambda j, i, k: (i, j))
        scratch_shapes = [pltpu.VMEM((tm, tn), jnp.float32)]
        dims = ("parallel", "parallel", "arbitrary")
        flops_k = size_pad

    vmem_limit = int(min(vmem_cap - (4 << 20), max(block_bytes + (4 << 20), 16 << 20)))

    cost = pl.CostEstimate(
        flops=2 * padded_batch * hd_pad * flops_k,
        transcendentals=0,
        bytes_accessed=x_in.size * xb + wt_in.size * wb + padded_batch * hd_pad * ob,
    )

    out = pl.pallas_call(
        kernel,
        out_shape=jax.ShapeDtypeStruct((padded_batch, hd_pad), out_dtype),
        grid_spec=pltpu.PrefetchScalarGridSpec(
            num_scalar_prefetch=0,
            grid=grid,
            in_specs=in_specs,
            out_specs=out_spec,
            scratch_shapes=scratch_shapes,
        ),
        compiler_params=pltpu.CompilerParams(
            dimension_semantics=dims,
            vmem_limit_bytes=vmem_limit,
        ),
        cost_estimate=cost,
        interpret=interpret,
    )(x_in, wt_in)

    if padded_batch != batch or hd_pad != hd_dim:
        out = out[:batch, :hd_dim]
    return out


if __name__ == "__main__":
    # Small shapes consistent with the module: flattened feature size `size`,
    # hyperdimensional output dim `hd_dim`.
    batch, size, hd_dim = 8, 256, 512

    key = jax.random.PRNGKey(0)
    kx, kw = jax.random.split(key)
    x = jax.random.normal(kx, (batch, size), dtype=jnp.float32)
    # Projection weight: Normal(0, 1), shape (hd_dim, size), non-trainable.
    w = jax.random.normal(kw, (hd_dim, size), dtype=jnp.float32)

    # One-time init (transpose + lane padding happen once, outside the forward hot path).
    wt = encoder_init(w)

    out = jax.block_until_ready(encoder_forward(x, wt, hd_dim=hd_dim))

    # Reference in plain JAX.
    y_ref = x @ w.T
    ref = jnp.where(y_ref > 0, 1.0, -1.0).astype(x.dtype)
    # Ignore elements whose projection is ~0: fp reassociation inside the kernel may
    # legitimately flip the sign there.
    safe = jnp.abs(y_ref) > 1e-4

    def check(o):
        assert o.shape == (batch, hd_dim)
        assert o.dtype == x.dtype
        assert bool(jnp.all(jnp.abs(o) == 1.0)), "output not hard-quantized"
        assert bool(jnp.all(jnp.where(safe, o == ref, True))), "mismatch vs reference"

    check(out)

    # Also exercise the K-split (f32-accumulator) fallback path at small scale.
    out_ks = jax.block_until_ready(encoder_forward(x, wt, hd_dim=hd_dim, max_k=128))
    check(out_ks)

    print("KERNEL_OK")
</pallas_src>

<mosaic_0001>
module attributes {stable_mosaic.version = 11 : i64} {
  func.func @_fullk_kernel(%arg0: i32, %arg1: i32, %arg2: memref<8x256xf32, #tpu.memory_space<vmem>>, %arg3: memref<256x256xf32, #tpu.memory_space<vmem>>, %arg4: memref<8x256xf32, #tpu.memory_space<vmem>>) attributes {dimension_semantics = [#tpu.dimension_semantics<parallel>, #tpu.dimension_semantics<parallel>], iteration_bounds = array<i64: 2, 1>, scalar_prefetch = 0 : i64, scratch_operands = 0 : i64, tpu.core_type = #tpu.core_type<tc>, window_params = [{transform_indices = @transform_0, window_bounds = array<i64: 8, 256>}, {transform_indices = @transform_1, window_bounds = array<i64: 256, 256>}, {transform_indices = @transform_2, window_bounds = array<i64: 8, 256>}]} {
    %c0 = arith.constant 0 : index
    %c0_0 = arith.constant 0 : index
    %0 = vector.load %arg2[%c0, %c0_0] : memref<8x256xf32, #tpu.memory_space<vmem>>, vector<8x256xf32>
    %c0_1 = arith.constant 0 : index
    %c0_2 = arith.constant 0 : index
    %1 = vector.load %arg3[%c0_1, %c0_2] : memref<256x256xf32, #tpu.memory_space<vmem>>, vector<256x256xf32>
    %cst = arith.constant dense<0.000000e+00> : vector<8x256xf32>
    %2 = tpu.matmul %0, %1, %cst {dimension_numbers = #tpu.dot_dimension_numbers<[1], [0], [0], [1], [0, 0, 1, 1], [], []>} : vector<8x256xf32>, vector<256x256xf32>, vector<8x256xf32> -> vector<8x256xf32>
    %cst_3 = arith.constant 0.000000e+00 : f32
    %3 = vector.broadcast %cst_3 : f32 to vector<8x256xf32>
    %4 = arith.cmpf ogt, %2, %3 : vector<8x256xf32>
    %cst_4 = arith.constant 1.000000e+00 : f32
    %cst_5 = arith.constant -1.000000e+00 : f32
    %5 = vector.broadcast %cst_4 : f32 to vector<8x256xf32>
    %6 = vector.broadcast %cst_5 : f32 to vector<8x256xf32>
    %7 = arith.select %4, %5, %6 : vector<8x256xi1>, vector<8x256xf32>
    %c0_6 = arith.constant 0 : index
    %c0_7 = arith.constant 0 : index
    %8 = vector.load %arg4[%c0_6, %c0_7] : memref<8x256xf32, #tpu.memory_space<vmem>>, vector<8x256xf32>
    tpu.vector_store %arg4[%c0_6, %c0_7], %7 {strides = array<i32>} : memref<8x256xf32, #tpu.memory_space<vmem>>, vector<8x256xf32>,
    return
  }
  func.func @transform_0(%arg0: i32, %arg1: i32) -> (i32, i32) {
    %c0_i32 = arith.constant 0 : i32
    %c0_i32_0 = arith.constant 0 : i32
    return %arg1, %c0_i32 : i32, i32
  }
  func.func @transform_1(%arg0: i32, %arg1: i32) -> (i32, i32) {
    %c0_i32 = arith.constant 0 : i32
    %c0_i32_0 = arith.constant 0 : i32
    return %c0_i32, %arg0 : i32, i32
  }
  func.func @transform_2(%arg0: i32, %arg1: i32) -> (i32, i32) {
    %c0_i32 = arith.constant 0 : i32
    return %arg1, %arg0 : i32, i32
  }
}

</mosaic_0001>

<llo_original>
// kernel: tpu_custom_call.1
$region0: #{tpu_custom_call.1}
  #allocation0 [shape = 'u32[]', space=smem, size = 0x4, offset = 0x4, fixed_abs, tag = 'smem constant byte address 0x4 - core index']
  #allocation1 [shape = 'u32[72,128]{1,0:T(1,128)}', space=vmem, size = 0x9000, scoped, tag = 'internal scratch']
  %s0 = inlined_call_operand.hbm [shape: f32[8,256], index: 0, kind: input, shape index: {}]
  %s1 = inlined_call_operand.hbm [shape: f32[256,512], index: 1, kind: input, shape index: {}]
  %s2 = inlined_call_operand.hbm [shape: f32[8,512], index: 2, kind: output, shape index: {}]
  %s3 = sld [smem:[#allocation0]]
  $region49: #{tpu_custom_call.1} parent=0
    _
  %s5 = ssub.s32 1, %s3
  %s6 = scalar_select 0, %s5, %s3
  $region1: #{tpu_custom_call.1} parent=0
    #allocation2 [shape = 'u8[8192]{0}', space=vmem, size = 0x2000, scoped, tag = 'input window, operand 0, single buffered']
    #allocation3 [shape = 's32[2]{0}', space=sflag, size = 0x8, scoped, tag = 'scoped memory for tpu_custom_call.1']
    #allocation4 [shape = 's32[2]{0}', space=sflag, size = 0x8, scoped, tag = 'scoped memory for tpu_custom_call.1']
    #allocation5 [shape = 'u8[524288]{0}', space=vmem, size = 0x80000, scoped, tag = 'input window, operand 1']
    #allocation6 [shape = 's32[2]{0}', space=sflag, size = 0x8, scoped, tag = 'scoped memory for tpu_custom_call.1']
    #allocation7 [shape = 'u8[16384]{0}', space=vmem, size = 0x4000, scoped, tag = 'output window, operand 0']
    %7 = vsyncpa [#allocation3], 0
    %8 = vsyncpa [#allocation6], 0
    %s9 = scalar_lea.sflag [#allocation6], 1
    %10 = vsyncpa %s9, 0
    %11 = vsyncpa [#allocation4], 0
    %s12 = scalar_lea.sflag [#allocation4], 1
    %13 = vsyncpa %s12, 0
    loop: start=0, step=1, limit=4
    $region2: #{tpu_custom_call.1} parent=1 // loop_pre_header
      _
    $region3: #{tpu_custom_call.1} parent=1 // loop_header
      %s15 = sphi 0, %s19
      %p16 = scmp.ge.s32.totalorder %s15, 4
      %s22 = sphi 0, %s34
      %s23 = sphi 0, %s30
      %s24 = sphi 0, %s22
      %s25 = sphi 0, %s23
      %s26 = sphi 0, %s24
      %s27 = sphi 0, %s25
      %s37 = sphi 0, %s39
      %s40 = sphi 0, %s37
      %s41 = sphi 0, %s40
      %s57 = sphi 0, %s41
      %s63 = sphi 0, %s65
      %s66 = sphi 0, %s63
      %s67 = sphi 0, %s66
      %s83 = sphi 0, %s67
      %s91 = sphi 0, %s93
      %s94 = sphi 0, %s91
      %s95 = sphi 0, %s94
      %s111 = sphi 0, %s95
    $region4: #{tpu_custom_call.1} parent=1 // loop_header_branch
      %18 = sbr.rel (%p16) target = $region8
    $region5: #{tpu_custom_call.1} parent=1 // loop_body
      %s20 = ssub.s32 %s15, 1
      %s21 = ssub.s32 %s15, 2
      %s28 = sadd.s32 1, %s23
      %p29 = scmp.ge.s32.totalorder %s28, 1
      %s30 = scalar_select %p29, 0, %s28
      %s31 = sadd.s32 1, %s22
      %s32 = scalar_select %p29, %s31, %s22
      %p33 = scmp.ge.s32.totalorder %s32, 2
      %s34 = scalar_select %p33, 0, %s32
      %s35 = ssub.s32 %s23, %s30
      %p36 = scmp.eq.s32.totalorder %s35, 0
      %s38 = sadd.s32 %s37, 1
      %s39 = scalar_select %p36, %s37, %s38
      %p42 = pneg %p36
      %p43 = scmp.eq.s32.totalorder %s15, 1
      %p44 = por %p42, %p43
      %p45 = scmp.ne.s32.totalorder %s37, %s40
      %p46 = scmp.eq.s32.totalorder %s15, 0
      %p47 = por %p45, %p46
      %p48 = scmp.ne.s32.totalorder %s37, %s40
      %p49 = scmp.eq.s32.totalorder %s20, 1
      %p50 = por %p48, %p49
      %p51 = scmp.ne.s32.totalorder %s40, %s41
      %p52 = scmp.eq.s32.totalorder %s20, 0
      %p53 = por %p51, %p52
      %p54 = scmp.ne.s32.totalorder %s40, %s41
      %p55 = scmp.eq.s32.totalorder %s21, 1
      %p56 = por %p54, %p55
      %p58 = scmp.ne.s32.totalorder %s41, %s57
      %p59 = scmp.eq.s32.totalorder %s21, 0
      %p60 = por %p58, %p59
      %s61 = ssub.s32 %s22, %s34
      %p62 = scmp.eq.s32.totalorder %s61, 0
      %s64 = sadd.s32 %s63, 1
      %s65 = scalar_select %p62, %s63, %s64
      %p68 = pneg %p62
      %p69 = scmp.eq.s32.totalorder %s15, 1
      %p70 = por %p68, %p69
      %p71 = scmp.ne.s32.totalorder %s63, %s66
      %p72 = scmp.eq.s32.totalorder %s15, 0
      %p73 = por %p71, %p72
      %p74 = scmp.ne.s32.totalorder %s63, %s66
      %p75 = scmp.eq.s32.totalorder %s20, 1
      %p76 = por %p74, %p75
      %p77 = scmp.ne.s32.totalorder %s66, %s67
      %p78 = scmp.eq.s32.totalorder %s20, 0
      %p79 = por %p77, %p78
      %p80 = scmp.ne.s32.totalorder %s66, %s67
      %p81 = scmp.eq.s32.totalorder %s21, 1
      %p82 = por %p80, %p81
      %p84 = scmp.ne.s32.totalorder %s67, %s83
      %p85 = scmp.eq.s32.totalorder %s21, 0
      %p86 = por %p84, %p85
      %s87 = ssub.s32 %s23, %s30
      %s88 = ssub.s32 %s22, %s34
      %s89 = sor.u32 %s87, %s88
      %p90 = scmp.eq.s32.totalorder %s89, 0
      %s92 = sadd.s32 %s91, 1
      %s93 = scalar_select %p90, %s91, %s92
      %p96 = pneg %p90
      %p97 = scmp.eq.s32.totalorder %s15, 1
      %p98 = por %p96, %p97
      %p99 = scmp.ne.s32.totalorder %s91, %s94
      %p100 = scmp.eq.s32.totalorder %s15, 0
      %p101 = por %p99, %p100
      %p102 = scmp.ne.s32.totalorder %s91, %s94
      %p103 = scmp.eq.s32.totalorder %s20, 1
      %p104 = por %p102, %p103
      %p105 = scmp.ne.s32.totalorder %s94, %s95
      %p106 = scmp.eq.s32.totalorder %s20, 0
      %p107 = por %p105, %p106
      %p108 = scmp.ne.s32.totalorder %s94, %s95
      %p109 = scmp.eq.s32.totalorder %s21, 1
      %p110 = por %p108, %p109
      %p112 = scmp.ne.s32.totalorder %s95, %s111
      %p113 = scmp.eq.s32.totalorder %s21, 0
      %p114 = por %p112, %p113
      %p115 = scmp.le.s32.totalorder 1, %s15
      %p116 = scmp.lt.s32.totalorder %s15, 3
      %p117 = pnand %p115, %p116
      %p118 = pneg %p117
      // Predicated region
      $region9: #{tpu_custom_call.1} parent=5 // pred_check
        _
      $region10: #{tpu_custom_call.1} parent=5 // pred_check_branch
        %120 = sbr.rel (%p117) target = $region12
      $region11: #{tpu_custom_call.1} parent=5 // pred_region
        %s121 = ssub.s32 %s15, 1
        // Predicated region
        $region13: #{tpu_custom_call.1} parent=11 // pred_check
          %p122 = pneg %p53
        $region14: #{tpu_custom_call.1} parent=11 // pred_check_branch
          %124 = sbr.rel (%p122) target = $region16
        $region15: #{tpu_custom_call.1} parent=11 // pred_region
          %126 = vsyncadd [#allocation3], 0
          %s127 = smul.addr %s25, 2
          %s128 = smul.addr %s127, 8
          %s129 = scalar_lea.hbm %s0, %s128
          %s131 = sshll.u32 %s129, 4
          %s132 = int_to_ptr.hbm [resolvable:$true] %s131
          %s133 = sshll.u32 [#allocation2], 4
          %s134 = int_to_ptr.vmem [resolvable:$true] %s133
          %136 = dma.hbm_to_vmem [thread:$0]  %s132, 256, %s134, [#allocation3]
        $region16: #{tpu_custom_call.1} parent=11 // pred_fallthru
          _
      $region12: #{tpu_custom_call.1} parent=5 // pred_fallthru
        _
      %p137 = scmp.lt.s32.totalorder %s15, 2
      // Predicated region
      $region17: #{tpu_custom_call.1} parent=5 // pred_check
        %p138 = pneg %p137
      $region18: #{tpu_custom_call.1} parent=5 // pred_check_branch
        %140 = sbr.rel (%p138) target = $region20
      $region19: #{tpu_custom_call.1} parent=5 // pred_region
        // Predicated region
        $region21: #{tpu_custom_call.1} parent=19 // pred_check
          %p141 = pneg %p73
        $region22: #{tpu_custom_call.1} parent=19 // pred_check_branch
          %143 = sbr.rel (%p141) target = $region24
        $region23: #{tpu_custom_call.1} parent=19 // pred_region
          %s144 = sand.u32 %s63, 1
          %s145 = scalar_lea.sflag [#allocation6], %s144
          %s146 = sand.u32 %s63, 1
          %s147 = smul.addr %s146, 512
          %s148 = scalar_lea.vmem [#allocation5], %s147
          %s149 = smul.u32 2, %s22
          %151 = vsyncadd %s145, 0
          %s152 = smul.addr %s149, 8
          %s153 = scalar_lea.hbm %s1, %s152
          %s154 = sshll.u32 %s153, 4
          %s155 = int_to_ptr.hbm [resolvable:$true] %s154
          %s156 = sshll.u32 %s148, 4
          %s157 = int_to_ptr.vmem [resolvable:$true] %s156
          %162 = dma.hbm_to_vmem [thread:$0]  %s155, 8192, %s157, %s145, 512, 256, 16
        $region24: #{tpu_custom_call.1} parent=19 // pred_fallthru
          _
      $region20: #{tpu_custom_call.1} parent=5 // pred_fallthru
        _
      %p163 = scmp.le.s32.totalorder 1, %s15
      %p164 = scmp.lt.s32.totalorder %s15, 3
      %p165 = pnand %p163, %p164
      %p166 = pneg %p165
      // Predicated region
      $region25: #{tpu_custom_call.1} parent=5 // pred_check
        _
      $region26: #{tpu_custom_call.1} parent=5 // pred_check_branch
        %168 = sbr.rel (%p165) target = $region28
      $region27: #{tpu_custom_call.1} parent=5 // pred_region
        %s169 = ssub.s32 %s15, 1
        // Predicated region
        $region29: #{tpu_custom_call.1} parent=27 // pred_check
          %p170 = pneg %p53
        $region30: #{tpu_custom_call.1} parent=27 // pred_check_branch
          %172 = sbr.rel (%p170) target = $region32
        $region31: #{tpu_custom_call.1} parent=27 // pred_region
          %174 = dma.done [#allocation3], 256
        $region32: #{tpu_custom_call.1} parent=27 // pred_fallthru
          _
        %s175 = sand.u32 %s66, 1
        %s176 = scalar_lea.sflag [#allocation6], %s175
        %s177 = sand.u32 %s66, 1
        %s178 = smul.addr %s177, 512
        %s179 = scalar_lea.vmem [#allocation5], %s178
        // Predicated region
        $region33: #{tpu_custom_call.1} parent=27 // pred_check
          %p180 = pneg %p79
        $region34: #{tpu_custom_call.1} parent=27 // pred_check_branch
          %182 = sbr.rel (%p180) target = $region36
        $region35: #{tpu_custom_call.1} parent=27 // pred_region
          %184 = dma.done %s176, 8192
        $region36: #{tpu_custom_call.1} parent=27 // pred_fallthru
          _
        %p185 = pneg %p53
        %p186 = pneg %p50
        %s187 = sand.u32 %s66, 1
        %s188 = scalar_lea.sflag [#allocation6], %s187
        %s189 = sand.u32 %s66, 1
        %s190 = smul.addr %s189, 512
        %s191 = scalar_lea.vmem [#allocation5], %s190
        %p192 = pneg %p79
        %p193 = pneg %p76
        %p194 = pneg %p107
        %p195 = pneg %p104
        %s196 = sand.u32 %s94, 1
        %s197 = scalar_lea.sflag [#allocation4], %s196
        %s198 = sand.u32 %s94, 1
        %s199 = smul.addr %s198, 16
        %s200 = scalar_lea.vmem [#allocation7], %s199
        %s201 = smul.u32 2, %s24
        %s202 = smul.u32 2, %s24
        %v203 = vld [vmem:[#allocation2] sm:$0xff]
        %v204 = vld [vmem:[#allocation2 + $0x8] sm:$0xff]
        %v205 = vld [vmem:[%s179] sm:$0xff]
        %v206 = vld [vmem:[%s179 + $0x8] sm:$0xff]
        %v207 = vld [vmem:[%s179 + $0x10] sm:$0xff]
        %v208 = vld [vmem:[%s179 + $0x18] sm:$0xff]
        %v209 = vld [vmem:[%s179 + $0x20] sm:$0xff]
        %v210 = vld [vmem:[%s179 + $0x28] sm:$0xff]
        %v211 = vld [vmem:[%s179 + $0x30] sm:$0xff]
        %v212 = vld [vmem:[%s179 + $0x38] sm:$0xff]
        %v213 = vld [vmem:[%s179 + $0x40] sm:$0xff]
        %v214 = vld [vmem:[%s179 + $0x48] sm:$0xff]
        %v215 = vld [vmem:[%s179 + $0x50] sm:$0xff]
        %v216 = vld [vmem:[%s179 + $0x58] sm:$0xff]
        %v217 = vld [vmem:[%s179 + $0x60] sm:$0xff]
        %v218 = vld [vmem:[%s179 + $0x68] sm:$0xff]
        %v219 = vld [vmem:[%s179 + $0x70] sm:$0xff]
        %v220 = vld [vmem:[%s179 + $0x78] sm:$0xff]
        %v221 = vld [vmem:[%s179 + $0x80] sm:$0xff]
        %v222 = vld [vmem:[%s179 + $0x88] sm:$0xff]
        %v223 = vld [vmem:[%s179 + $0x90] sm:$0xff]
        %v224 = vld [vmem:[%s179 + $0x98] sm:$0xff]
        %v225 = vld [vmem:[%s179 + $0xa0] sm:$0xff]
        %v226 = vld [vmem:[%s179 + $0xa8] sm:$0xff]
        %v227 = vld [vmem:[%s179 + $0xb0] sm:$0xff]
        %v228 = vld [vmem:[%s179 + $0xb8] sm:$0xff]
        %v229 = vld [vmem:[%s179 + $0xc0] sm:$0xff]
        %v230 = vld [vmem:[%s179 + $0xc8] sm:$0xff]
        %v231 = vld [vmem:[%s179 + $0xd0] sm:$0xff]
        %v232 = vld [vmem:[%s179 + $0xd8] sm:$0xff]
        %v233 = vld [vmem:[%s179 + $0xe0] sm:$0xff]
        %v234 = vld [vmem:[%s179 + $0xe8] sm:$0xff]
        %v235 = vld [vmem:[%s179 + $0xf0] sm:$0xff]
        %v236 = vld [vmem:[%s179 + $0xf8] sm:$0xff]
        %v237 = vld [vmem:[%s179 + $0x100] sm:$0xff]
        %v238 = vld [vmem:[%s179 + $0x108] sm:$0xff]
        %v239 = vld [vmem:[%s179 + $0x110] sm:$0xff]
        %v240 = vld [vmem:[%s179 + $0x118] sm:$0xff]
        %v241 = vld [vmem:[%s179 + $0x120] sm:$0xff]
        %v242 = vld [vmem:[%s179 + $0x128] sm:$0xff]
        %v243 = vld [vmem:[%s179 + $0x130] sm:$0xff]
        %v244 = vld [vmem:[%s179 + $0x138] sm:$0xff]
        %v245 = vld [vmem:[%s179 + $0x140] sm:$0xff]
        %v246 = vld [vmem:[%s179 + $0x148] sm:$0xff]
        %v247 = vld [vmem:[%s179 + $0x150] sm:$0xff]
        %v248 = vld [vmem:[%s179 + $0x158] sm:$0xff]
        %v249 = vld [vmem:[%s179 + $0x160] sm:$0xff]
        %v250 = vld [vmem:[%s179 + $0x168] sm:$0xff]
        %v251 = vld [vmem:[%s179 + $0x170] sm:$0xff]
        %v252 = vld [vmem:[%s179 + $0x178] sm:$0xff]
        %v253 = vld [vmem:[%s179 + $0x180] sm:$0xff]
        %v254 = vld [vmem:[%s179 + $0x188] sm:$0xff]
        %v255 = vld [vmem:[%s179 + $0x190] sm:$0xff]
        %v256 = vld [vmem:[%s179 + $0x198] sm:$0xff]
        %v257 = vld [vmem:[%s179 + $0x1a0] sm:$0xff]
        %v258 = vld [vmem:[%s179 + $0x1a8] sm:$0xff]
        %v259 = vld [vmem:[%s179 + $0x1b0] sm:$0xff]
        %v260 = vld [vmem:[%s179 + $0x1b8] sm:$0xff]
        %v261 = vld [vmem:[%s179 + $0x1c0] sm:$0xff]
        %v262 = vld [vmem:[%s179 + $0x1c8] sm:$0xff]
        %v263 = vld [vmem:[%s179 + $0x1d0] sm:$0xff]
        %v264 = vld [vmem:[%s179 + $0x1d8] sm:$0xff]
        %v265 = vld [vmem:[%s179 + $0x1e0] sm:$0xff]
        %v266 = vld [vmem:[%s179 + $0x1e8] sm:$0xff]
        %v267 = vld [vmem:[%s179 + $0x1f0] sm:$0xff]
        %v268 = vld [vmem:[%s179 + $0x1f8] sm:$0xff]
        %269 = vmatpush.msra.mxu0 %v235
        %270 = vmatpush.msra.mxu0 %v233
        %271 = vmatpush.msra.mxu0 %v231
        %272 = vmatpush.msra.mxu0 %v229
        %273 = vmatpush.msra.mxu0 %v227
        %274 = vmatpush.msra.mxu0 %v225
        %275 = vmatpush.msra.mxu0 %v223
        %276 = vmatpush.msra.mxu0 %v221
        %277 = vmatpush.msra.mxu0 %v219
        %278 = vmatpush.msra.mxu0 %v217
        %279 = vmatpush.msra.mxu0 %v215
        %280 = vmatpush.msra.mxu0 %v213
        %281 = vmatpush.msra.mxu0 %v211
        %282 = vmatpush.msra.mxu0 %v209
        %283 = vmatpush.msra.mxu0 %v207
        %284 = vmatpush.msra.mxu0 %v205
        %285 = vmatmul.f32.gmra.mxu0 %v203
        %v286 = vpop.f32.mrf.mxu0
        %v287 = vadd.f32 0.0, %v286
        %288 = vdwg.mxu0
        %289 = vmatpush.msra.mxu0 %v267
        %290 = vmatpush.msra.mxu0 %v265
        %291 = vmatpush.msra.mxu0 %v263
        %292 = vmatpush.msra.mxu0 %v261
        %293 = vmatpush.msra.mxu0 %v259
        %294 = vmatpush.msra.mxu0 %v257
        %295 = vmatpush.msra.mxu0 %v255
        %296 = vmatpush.msra.mxu0 %v253
        %297 = vmatpush.msra.mxu0 %v251
        %298 = vmatpush.msra.mxu0 %v249
        %299 = vmatpush.msra.mxu0 %v247
        %300 = vmatpush.msra.mxu0 %v245
        %301 = vmatpush.msra.mxu0 %v243
        %302 = vmatpush.msra.mxu0 %v241
        %303 = vmatpush.msra.mxu0 %v239
        %304 = vmatpush.msra.mxu0 %v237
        %305 = vmatmul.f32.gmra.mxu0 %v204
        %v306 = vpop.f32.mrf.mxu0
        %v307 = vadd.f32 %v287, %v306
        %308 = vdwg.mxu0
        %309 = vmatpush.msra.mxu0 %v236
        %310 = vmatpush.msra.mxu0 %v234
        %311 = vmatpush.msra.mxu0 %v232
        %312 = vmatpush.msra.mxu0 %v230
        %313 = vmatpush.msra.mxu0 %v228
        %314 = vmatpush.msra.mxu0 %v226
        %315 = vmatpush.msra.mxu0 %v224
        %316 = vmatpush.msra.mxu0 %v222
        %317 = vmatpush.msra.mxu0 %v220
        %318 = vmatpush.msra.mxu0 %v218
        %319 = vmatpush.msra.mxu0 %v216
        %320 = vmatpush.msra.mxu0 %v214
        %321 = vmatpush.msra.mxu0 %v212
        %322 = vmatpush.msra.mxu0 %v210
        %323 = vmatpush.msra.mxu0 %v208
        %324 = vmatpush.msra.mxu0 %v206
        %325 = vmatmul.f32.gmra.mxu0 %v203
        %v326 = vpop.f32.mrf.mxu0
        %v327 = vadd.f32 0.0, %v326
        %328 = vdwg.mxu0
        %329 = vmatpush.msra.mxu0 %v268
        %330 = vmatpush.msra.mxu0 %v266
        %331 = vmatpush.msra.mxu0 %v264
        %332 = vmatpush.msra.mxu0 %v262
        %333 = vmatpush.msra.mxu0 %v260
        %334 = vmatpush.msra.mxu0 %v258
        %335 = vmatpush.msra.mxu0 %v256
        %336 = vmatpush.msra.mxu0 %v254
        %337 = vmatpush.msra.mxu0 %v252
        %338 = vmatpush.msra.mxu0 %v250
        %339 = vmatpush.msra.mxu0 %v248
        %340 = vmatpush.msra.mxu0 %v246
        %341 = vmatpush.msra.mxu0 %v244
        %342 = vmatpush.msra.mxu0 %v242
        %343 = vmatpush.msra.mxu0 %v240
        %344 = vmatpush.msra.mxu0 %v238
        %345 = vmatmul.f32.gmra.mxu0 %v204
        %v346 = vpop.f32.mrf.mxu0
        %v347 = vadd.f32 %v327, %v346
        %348 = vdwg.mxu0
        %vm349 = vcmp.gt.f32.partialorder %v307, 0.0
        %vm350 = vcmp.gt.f32.partialorder %v347, 0.0
        %v351 = vsel %vm349, 1.0, -1.0
        %v352 = vsel %vm350, 1.0, -1.0
        %353 = vst [vmem:[%s200] sm:$0xff] %v351
        %354 = vst [vmem:[%s200 + $0x8] sm:$0xff] %v352
        %s355 = sand.u32 %s94, 1
        %s356 = scalar_lea.sflag [#allocation4], %s355
        %s357 = sand.u32 %s94, 1
        %s358 = smul.addr %s357, 16
        %s359 = scalar_lea.vmem [#allocation7], %s358
        // Predicated region
        $region37: #{tpu_custom_call.1} parent=27 // pred_check
          %p360 = pneg %p104
        $region38: #{tpu_custom_call.1} parent=27 // pred_check_branch
          %362 = sbr.rel (%p360) target = $region40
        $region39: #{tpu_custom_call.1} parent=27 // pred_region
          %s363 = smul.u32 2, %s24
          %365 = vsyncadd %s356, 0
          %s366 = smul.addr %s25, 4
          %s367 = sadd.s32 %s363, %s366
          %s368 = smul.addr %s367, 8
          %s369 = scalar_lea.hbm %s2, %s368
          %s371 = sshll.u32 %s359, 4
          %s372 = int_to_ptr.vmem [resolvable:$true] %s371
          %s373 = sshll.u32 %s369, 4
          %s374 = int_to_ptr.hbm [resolvable:$true] %s373
          %376 = dma.vmem_to_hbm [thread:$0]  %s372, 256, %s374, %s356
        $region40: #{tpu_custom_call.1} parent=27 // pred_fallthru
          _
      $region28: #{tpu_custom_call.1} parent=5 // pred_fallthru
        _
      %p377 = scmp.le.s32.totalorder 2, %s15
      // Predicated region
      $region41: #{tpu_custom_call.1} parent=5 // pred_check
        %p378 = pneg %p377
      $region42: #{tpu_custom_call.1} parent=5 // pred_check_branch
        %380 = sbr.rel (%p378) target = $region44
      $region43: #{tpu_custom_call.1} parent=5 // pred_region
        %s381 = ssub.s32 %s15, 2
        // Predicated region
        $region45: #{tpu_custom_call.1} parent=43 // pred_check
          %p382 = pneg %p110
        $region46: #{tpu_custom_call.1} parent=43 // pred_check_branch
          %384 = sbr.rel (%p382) target = $region48
        $region47: #{tpu_custom_call.1} parent=43 // pred_region
          %s385 = sand.u32 %s95, 1
          %s386 = scalar_lea.sflag [#allocation4], %s385
          %s387 = sand.u32 %s95, 1
          %s388 = smul.addr %s387, 16
          %s389 = scalar_lea.vmem [#allocation7], %s388
          %391 = dma.done %s386, 256
        $region48: #{tpu_custom_call.1} parent=43 // pred_fallthru
          _
      $region44: #{tpu_custom_call.1} parent=5 // pred_fallthru
        _
    $region6: #{tpu_custom_call.1} parent=1 // loop_footer
      %s19 = sadd.s32 1, %s15
    $region7: #{tpu_custom_call.1} parent=1 // loop_footer_branch
      %14 = sbr.rel target = $region3
    $region8: #{tpu_custom_call.1} parent=1 // loop_exit
      _
    %392 = vsyncpa [#allocation3], 1
    %s393 = scalar_lea.sflag [#allocation3], 1
    %394 = vsyncpa %s393, 1
    %395 = vsyncpa [#allocation6], 1
    %s396 = scalar_lea.sflag [#allocation6], 1
    %397 = vsyncpa %s396, 1
    %398 = vsyncpa [#allocation4], 1
    %s399 = scalar_lea.sflag [#allocation4], 1
    %400 = vsyncpa %s399, 1

</llo_original>
